<compile_context>
chip_gen: v7x
topology: tpu7x:2x2x1
jax: 0.10.0
libtpu: 0.0.40
codegen_flags: <defaults>
</compile_context>

<pallas_src>
import functools
import math

import jax
import jax.numpy as jnp
from jax import lax
from jax.experimental import pallas as pl
from jax.experimental.pallas import tpu as pltpu


# HBM DMA-gather fallback tuning knobs.
_GROUP = 8              # embedding rows gathered per inner step (one dense (8, D) store)
_NBUF = 4               # row groups kept in flight (outstanding-DMA depth)
_MAX_SMEM_IDS = 32768   # max ids scalar-prefetched into SMEM per pallas_call


def _round_up(x, m):
    return (x + m - 1) // m * m


def _vmem_capacity_bytes():
    """Physical VMEM per core for the local TPU generation (safe fallback)."""
    try:
        return int(pltpu.get_tpu_info().vmem_capacity_bytes)
    except Exception:
        return 64 << 20  # conservative: v7x has 64 MiB per TensorCore


def _choose_plan(n_tokens, vocab, d, itemsize, tokens_per_block, onehot_max_vocab):
    """Pick (path, tokens_per_step, vmem_limit_bytes) from the VMEM budget."""
    usable = int(_vmem_capacity_bytes() * 0.8)   # headroom for compiler scratch
    table_bytes = vocab * d * itemsize
    t0 = min(_round_up(tokens_per_block, 8), _round_up(n_tokens, 8))

    def shrink(t, fits):
        while t > 8 and not fits(t):
            t = _round_up(t // 2, 8)
        return t

    def onehot_bytes(t):
        return (table_bytes                    # resident table, single copy
                + 2 * t * d * itemsize         # double-buffered output tiles
                + 2 * t * 4                    # double-buffered (t, 1) id tiles
                + t * max(vocab, 128) * 4      # in-kernel (t, V) one-hot temporary
                + (2 << 20))                   # slack

    def hbm_bytes(t):
        return (2 * t * d * itemsize           # double-buffered output tiles
                + _NBUF * _GROUP * d * itemsize
                + (2 << 20))

    if vocab <= onehot_max_vocab:
        t = shrink(t0, lambda tt: onehot_bytes(tt) <= usable)
        if onehot_bytes(t) <= usable:
            limit = min(usable, max(32 << 20, onehot_bytes(t) + (8 << 20)))
            return "onehot", t, limit

    t = shrink(t0, lambda tt: hbm_bytes(tt) <= usable)
    limit = min(usable, max(32 << 20, hbm_bytes(t) + (8 << 20)))
    return "hbm", t, limit


# ---------------------------------------------------------------------------
# Path A: one-hot MXU lookup against a VMEM-resident table (small/medium V).
# ---------------------------------------------------------------------------
def _onehot_embed_kernel(ids_ref, emb_ref, out_ref, *, scale):
    """out[t, :] = scale * emb[ids[t], :] via one (T, V) x (V, D) MXU matmul.

    ids_ref : VMEM (T, 1) int32  -- token ids for this block.
    emb_ref : VMEM (V, D)        -- full table (single resident copy).
    out_ref : VMEM (T, D)        -- dense output tile.
    """
    t = out_ref.shape[0]
    v = emb_ref.shape[0]
    ids = ids_ref[...]                                        # (T, 1)
    vocab_iota = lax.broadcasted_iota(jnp.int32, (t, v), 1)   # (T, V)
    # Fold sqrt(d_model) into the "hot" value so the MXU applies the scale too.
    one_hot = jnp.where(vocab_iota == ids, scale, 0.0).astype(jnp.float32)
    out_ref[...] = jnp.dot(
        one_hot,
        emb_ref[...].astype(jnp.float32),
        preferred_element_type=jnp.float32,
    ).astype(out_ref.dtype)


def _embed_onehot(flat_ids, emb_table, scale, t, vmem_limit, *, single_buffer_table):
    n_pad = flat_ids.shape[0]
    v, d = emb_table.shape
    ids2d = flat_ids.reshape(n_pad, 1)

    if single_buffer_table:
        # Whole table as one un-blocked VMEM operand: copied to VMEM once and
        # kept resident with NO double-buffering (unlike a blocked (V, D) spec).
        table_spec = pl.BlockSpec(memory_space=pltpu.MemorySpace.VMEM)
    else:
        table_spec = pl.BlockSpec((v, d), lambda i: (0, 0))

    return pl.pallas_call(
        functools.partial(_onehot_embed_kernel, scale=scale),
        out_shape=jax.ShapeDtypeStruct((n_pad, d), emb_table.dtype),
        grid=(n_pad // t,),
        in_specs=[
            pl.BlockSpec((t, 1), lambda i: (i, 0)),   # per-block ids (VMEM)
            table_spec,                               # resident table
        ],
        out_specs=pl.BlockSpec((t, d), lambda i: (i, 0)),
        compiler_params=pltpu.CompilerParams(
            dimension_semantics=("parallel",),
            vmem_limit_bytes=vmem_limit,
        ),
    )(ids2d, emb_table)


# ---------------------------------------------------------------------------
# Path B: HBM DMA-gather fallback (large V / table does not fit in VMEM).
# ---------------------------------------------------------------------------
def _hbm_gather_kernel(ids_ref, emb_hbm, out_ref, rows_buf, sems, *, scale):
    """Gather T rows from the HBM table, 8 rows per dense (8, D) store.

    ids_ref  : SMEM (n_chunk,) int32  -- scalar-prefetched token ids (whole chunk).
    emb_hbm  : ANY  (V, D)            -- embedding table, left in HBM.
    out_ref  : VMEM (T, D)            -- dense output tile for this token block.
    rows_buf : VMEM (_NBUF, 8, D)     -- rotating DMA staging buffers.
    sems     : DMA  (_NBUF,)          -- one semaphore per in-flight row group.
    """
    t, _ = out_ref.shape
    n_groups = t // _GROUP
    tok_base = pl.multiple_of(pl.program_id(0) * t, _GROUP)

    def issue_group(g, slot):
        for r in range(_GROUP):
            tok = ids_ref[tok_base + g * _GROUP + r]
            pltpu.make_async_copy(
                emb_hbm.at[pl.ds(tok, 1), :],
                rows_buf.at[slot, pl.ds(r, 1), :],
                sems.at[slot],
            ).start()

    def wait_group(slot):
        # All _GROUP row copies of this slot share one semaphore; wait for each.
        for r in range(_GROUP):
            pltpu.make_async_copy(
                emb_hbm.at[pl.ds(0, 1), :],
                rows_buf.at[slot, pl.ds(r, 1), :],
                sems.at[slot],
            ).wait()

    # Prime up to _NBUF row groups.
    for g in range(min(_NBUF, n_groups)):
        issue_group(g, g)

    def body(g, carry):
        slot = g % _NBUF
        wait_group(slot)
        base = pl.multiple_of(g * _GROUP, _GROUP)
        out_ref[pl.ds(base, _GROUP), :] = (rows_buf[slot] * scale).astype(out_ref.dtype)

        @pl.when(g + _NBUF < n_groups)
        def _():
            issue_group(g + _NBUF, slot)

        return carry

    lax.fori_loop(0, n_groups, body, 0)


def _embed_hbm_gather(flat_ids, emb_table, scale, t, vmem_limit):
    n_pad = flat_ids.shape[0]
    _, d = emb_table.shape
    # Chunk the token stream so each call's scalar-prefetched id array stays
    # small (a 1-D SMEM array pads to next_pow2(4N) bytes).
    chunk = max(t, (_MAX_SMEM_IDS // t) * t)
    outs = []
    for start in range(0, n_pad, chunk):
        ids_c = flat_ids[start:start + chunk]
        n_c = ids_c.shape[0]          # multiple of t by construction
        out_c = pl.pallas_call(
            functools.partial(_hbm_gather_kernel, scale=scale),
            out_shape=jax.ShapeDtypeStruct((n_c, d), emb_table.dtype),
            grid_spec=pltpu.PrefetchScalarGridSpec(
                num_scalar_prefetch=1,
                grid=(n_c // t,),
                in_specs=[pl.BlockSpec(memory_space=pl.ANY)],   # table stays in HBM
                out_specs=pl.BlockSpec((t, d), lambda i, ids: (i, 0)),
                scratch_shapes=[
                    pltpu.VMEM((_NBUF, _GROUP, d), emb_table.dtype),
                    pltpu.SemaphoreType.DMA((_NBUF,)),
                ],
            ),
            compiler_params=pltpu.CompilerParams(
                dimension_semantics=("arbitrary",),
                vmem_limit_bytes=vmem_limit,
            ),
        )(ids_c, emb_table)
        outs.append(out_c)
    return outs[0] if len(outs) == 1 else jnp.concatenate(outs, axis=0)


# ---------------------------------------------------------------------------
# Public wrapper.
# ---------------------------------------------------------------------------
def embeddings_forward(token_ids, emb_table, d_model, *,
                       tokens_per_block=512, onehot_max_vocab=2048):
    """token_ids: int array (...,) -> (..., D) = emb_table[token_ids] * sqrt(d_model)."""
    lead_shape = token_ids.shape
    v, d = emb_table.shape
    n = math.prod(lead_shape)
    scale = float(math.sqrt(d_model))
    itemsize = jnp.dtype(emb_table.dtype).itemsize

    # Clamp ids for memory safety (PyTorch nn.Embedding errors on OOB ids).
    flat_ids = jnp.clip(token_ids.reshape(n).astype(jnp.int32), 0, v - 1)

    path, t, vmem_limit = _choose_plan(
        n, v, d, itemsize, tokens_per_block, onehot_max_vocab)

    n_pad = _round_up(n, t)
    if n_pad != n:
        flat_ids = jnp.pad(flat_ids, (0, n_pad - n))   # pad ids = 0 (valid row)

    if path == "onehot":
        try:
            out_flat = _embed_onehot(flat_ids, emb_table, scale, t, vmem_limit,
                                     single_buffer_table=True)
        except Exception:
            # Compatibility fallback: if this JAX version rejects an un-blocked
            # VMEM operand, fall back to a blocked constant-index table spec
            # (functionally identical, costs a second table buffer).
            bigger = min(int(_vmem_capacity_bytes() * 0.8),
                         vmem_limit + v * d * itemsize)
            out_flat = _embed_onehot(flat_ids, emb_table, scale, t, bigger,
                                     single_buffer_table=False)
    else:
        out_flat = _embed_hbm_gather(flat_ids, emb_table, scale, t, vmem_limit)

    return out_flat[:n].reshape(*lead_shape, d)


if __name__ == "__main__":
    vocab_size = 128
    d_model = 128
    batch, seq = 2, 64   # 128 tokens -> 2 grid steps at tokens_per_block=64

    key = jax.random.PRNGKey(0)
    k_emb, k_ids = jax.random.split(key)

    # nn.Embedding default init is N(0, 1).
    emb_table = jax.random.normal(k_emb, (vocab_size, d_model), dtype=jnp.float32)
    token_ids = jax.random.randint(k_ids, (batch, seq), 0, vocab_size, dtype=jnp.int32)

    out = embeddings_forward(token_ids, emb_table, d_model, tokens_per_block=64)
    out = jax.block_until_ready(out)

    # Pure-JAX reference: gather * sqrt(d_model).
    ref = jnp.take(emb_table, token_ids, axis=0) * math.sqrt(d_model)
    assert out.shape == (batch, seq, d_model)
    # Tolerance covers MXU f32 pass rounding (can be bf16-level depending on
    # generation / default matmul precision); a wrong row or a missing
    # sqrt(d_model) scale would be off by O(1..10) and still fail this check.
    assert jnp.allclose(out, ref, atol=1e-2, rtol=1e-2), "mismatch vs reference"

    print("KERNEL_OK")
</pallas_src>

<mosaic_0001>
module attributes {stable_mosaic.version = 11 : i64} {
  func.func @_onehot_embed_kernel(%arg0: i32, %arg1: memref<64x1xi32, #tpu.memory_space<vmem>>, %arg2: memref<128x128xf32, #tpu.memory_space<vmem>>, %arg3: memref<64x128xf32, #tpu.memory_space<vmem>>) attributes {dimension_semantics = [#tpu.dimension_semantics<parallel>], iteration_bounds = array<i64: 2>, scalar_prefetch = 0 : i64, scratch_operands = 0 : i64, tpu.core_type = #tpu.core_type<tc>, window_params = [{transform_indices = @transform_0, window_bounds = array<i64: 64, 1>}, {pipeline_mode = #tpu.pipeline_mode<synchronous>, transform_indices = @transform_1, window_bounds = array<i64: 128, 128>}, {transform_indices = @transform_2, window_bounds = array<i64: 64, 128>}]} {
    %c0 = arith.constant 0 : index
    %c0_0 = arith.constant 0 : index
    %0 = vector.load %arg1[%c0, %c0_0] : memref<64x1xi32, #tpu.memory_space<vmem>>, vector<64x1xi32>
    %1 = tpu.iota {dimensions = array<i32: 1>} : vector<64x128xi32>
    %2 = vector.broadcast %0 : vector<64x1xi32> to vector<64x128xi32>
    %3 = arith.cmpi eq, %1, %2 : vector<64x128xi32>
    %cst = arith.constant 11.3137083 : f32
    %cst_1 = arith.constant 0.000000e+00 : f32
    %4 = vector.broadcast %cst : f32 to vector<64x128xf32>
    %5 = vector.broadcast %cst_1 : f32 to vector<64x128xf32>
    %6 = arith.select %3, %4, %5 : vector<64x128xi1>, vector<64x128xf32>
    %c0_2 = arith.constant 0 : index
    %c0_3 = arith.constant 0 : index
    %7 = vector.load %arg2[%c0_2, %c0_3] : memref<128x128xf32, #tpu.memory_space<vmem>>, vector<128x128xf32>
    %cst_4 = arith.constant dense<0.000000e+00> : vector<64x128xf32>
    %8 = tpu.matmul %6, %7, %cst_4 {dimension_numbers = #tpu.dot_dimension_numbers<[1], [0], [0], [1], [0, 0, 1, 1], [], []>} : vector<64x128xf32>, vector<128x128xf32>, vector<64x128xf32> -> vector<64x128xf32>
    %c0_5 = arith.constant 0 : index
    %c0_6 = arith.constant 0 : index
    %9 = vector.load %arg3[%c0_5, %c0_6] : memref<64x128xf32, #tpu.memory_space<vmem>>, vector<64x128xf32>
    tpu.vector_store %arg3[%c0_5, %c0_6], %8 {strides = array<i32>} : memref<64x128xf32, #tpu.memory_space<vmem>>, vector<64x128xf32>,
    return
  }
  func.func @transform_0(%arg0: i32) -> (i32, i32) {
    %c0_i32 = arith.constant 0 : i32
    %c0_i32_0 = arith.constant 0 : i32
    return %arg0, %c0_i32 : i32, i32
  }
  func.func @transform_1(%arg0: i32) -> (i32, i32) {
    %c0_i32 = arith.constant 0 : i32
    %c0_i32_0 = arith.constant 0 : i32
    %c0_i32_1 = arith.constant 0 : i32
    return %c0_i32, %c0_i32_0 : i32, i32
  }
  func.func @transform_2(%arg0: i32) -> (i32, i32) {
    %c0_i32 = arith.constant 0 : i32
    %c0_i32_0 = arith.constant 0 : i32
    return %arg0, %c0_i32 : i32, i32
  }
}

module attributes {stable_mosaic.version = 11 : i64} {
  func.func @_onehot_embed_kernel(%arg0: i32, %arg1: memref<64x1xi32, #tpu.memory_space<vmem>>, %arg2: memref<128x128xf32, #tpu.memory_space<vmem>>, %arg3: memref<64x128xf32, #tpu.memory_space<vmem>>) attributes {dimension_semantics = [#tpu.dimension_semantics<parallel>], iteration_bounds = array<i64: 2>, scalar_prefetch = 0 : i64, scratch_operands = 0 : i64, tpu.core_type = #tpu.core_type<tc>, window_params = [{transform_indices = @transform_0, window_bounds = array<i64: 64, 1>}, {pipeline_mode = #tpu.pipeline_mode<synchronous>, transform_indices = @transform_1, window_bounds = array<i64: 128, 128>}, {transform_indices = @transform_2, window_bounds = array<i64: 64, 128>}]} {
    %c0 = arith.constant 0 : index
    %c0_0 = arith.constant 0 : index
    %0 = vector.load %arg1[%c0, %c0_0] : memref<64x1xi32, #tpu.memory_space<vmem>>, vector<64x1xi32>
    %1 = tpu.iota {dimensions = array<i32: 1>} : vector<64x128xi32>
    %2 = vector.broadcast %0 : vector<64x1xi32> to vector<64x128xi32>
    %3 = arith.cmpi eq, %1, %2 : vector<64x128xi32>
    %cst = arith.constant 11.3137083 : f32
    %cst_1 = arith.constant 0.000000e+00 : f32
    %4 = vector.broadcast %cst : f32 to vector<64x128xf32>
    %5 = vector.broadcast %cst_1 : f32 to vector<64x128xf32>
    %6 = arith.select %3, %4, %5 : vector<64x128xi1>, vector<64x128xf32>
    %c0_2 = arith.constant 0 : index
    %c0_3 = arith.constant 0 : index
    %7 = vector.load %arg2[%c0_2, %c0_3] : memref<128x128xf32, #tpu.memory_space<vmem>>, vector<128x128xf32>
    %cst_4 = arith.constant dense<0.000000e+00> : vector<64x128xf32>
    %8 = tpu.matmul %6, %7, %cst_4 {dimension_numbers = #tpu.dot_dimension_numbers<[1], [0], [0], [1], [0, 0, 1, 1], [], []>} : vector<64x128xf32>, vector<128x128xf32>, vector<64x128xf32> -> vector<64x128xf32>
    %c0_5 = arith.constant 0 : index
    %c0_6 = arith.constant 0 : index
    %9 = vector.load %arg3[%c0_5, %c0_6] : memref<64x128xf32, #tpu.memory_space<vmem>>, vector<64x128xf32>
    tpu.vector_store %arg3[%c0_5, %c0_6], %8 {strides = array<i32>} : memref<64x128xf32, #tpu.memory_space<vmem>>, vector<64x128xf32>,
    return
  }
  func.func @transform_0(%arg0: i32) -> (i32, i32) {
    %c0_i32 = arith.constant 0 : i32
    %c0_i32_0 = arith.constant 0 : i32
    return %arg0, %c0_i32 : i32, i32
  }
  func.func @transform_1(%arg0: i32) -> (i32, i32) {
    %c0_i32 = arith.constant 0 : i32
    %c0_i32_0 = arith.constant 0 : i32
    %c0_i32_1 = arith.constant 0 : i32
    return %c0_i32, %c0_i32_0 : i32, i32
  }
  func.func @transform_2(%arg0: i32) -> (i32, i32) {
    %c0_i32 = arith.constant 0 : i32
    %c0_i32_0 = arith.constant 0 : i32
    return %arg0, %c0_i32 : i32, i32
  }
}

</mosaic_0001>

<llo_original>
// kernel: tpu_custom_call.1
$region0: #{tpu_custom_call.1}
  #allocation0 [shape = 'u32[]', space=smem, size = 0x4, offset = 0x4, fixed_abs, tag = 'smem constant byte address 0x4 - core index']
  #allocation1 [shape = 'u32[144,128]{1,0:T(1,128)}', space=vmem, size = 0x12000, scoped, tag = 'internal scratch']
  %s0 = inlined_call_operand.vmem [shape: s32[128,1], index: 0, kind: input, shape index: {}]
  %s1 = inlined_call_operand.vmem [shape: f32[128,128], index: 1, kind: input, shape index: {}]
  %s2 = inlined_call_operand.hbm [shape: f32[128,128], index: 2, kind: output, shape index: {}]
  %s3 = sld [smem:[#allocation0]]
  $region41: #{tpu_custom_call.1} parent=0
    _
  %s5 = ssub.s32 1, %s3
  %s6 = scalar_select 0, %s5, %s3
  $region1: #{tpu_custom_call.1} parent=0
    #allocation2 [shape = 'u8[65536]{0}', space=vmem, size = 0x10000, scoped, tag = 'output window, operand 0']
    #allocation3 [shape = 's32[2]{0}', space=sflag, size = 0x8, scoped, tag = 'scoped memory for tpu_custom_call.1']
    %7 = vsyncpa [#allocation3], 0
    %s8 = scalar_lea.sflag [#allocation3], 1
    %9 = vsyncpa %s8, 0
    loop: start=0, step=1, limit=4
    $region2: #{tpu_custom_call.1} parent=1 // loop_pre_header
      _
    $region3: #{tpu_custom_call.1} parent=1 // loop_header
      %s11 = sphi 0, %s15
      %p12 = scmp.ge.s32.totalorder %s11, 4
      %s21 = sphi 0, %s23
      %s24 = sphi 0, %s21
      %s25 = sphi 0, %s24
      %s41 = sphi 0, %s25
      %s45 = sphi 0, %s45
      %s47 = sphi 0, %s45
      %s48 = sphi 0, %s47
      %s62 = sphi 0, %s48
      %s68 = sphi 0, %s70
      %s71 = sphi 0, %s68
      %s72 = sphi 0, %s71
      %s88 = sphi 0, %s72
    $region4: #{tpu_custom_call.1} parent=1 // loop_header_branch
      %14 = sbr.rel (%p12) target = $region8
    $region5: #{tpu_custom_call.1} parent=1 // loop_body
      %s16 = ssub.s32 %s11, 1
      %s17 = ssub.s32 %s11, 2
      %s18 = sadd.s32 %s11, 1
      %s19 = ssub.s32 %s11, %s18
      %p20 = scmp.eq.s32.totalorder %s19, 0
      %s22 = sadd.s32 %s21, 1
      %s23 = scalar_select %p20, %s21, %s22
      %p26 = pneg %p20
      %p27 = scmp.eq.s32.totalorder %s11, 1
      %p28 = por %p26, %p27
      %p29 = scmp.ne.s32.totalorder %s21, %s24
      %p30 = scmp.eq.s32.totalorder %s11, 0
      %p31 = por %p29, %p30
      %p32 = scmp.ne.s32.totalorder %s21, %s24
      %p33 = scmp.eq.s32.totalorder %s16, 1
      %p34 = por %p32, %p33
      %p35 = scmp.ne.s32.totalorder %s24, %s25
      %p36 = scmp.eq.s32.totalorder %s16, 0
      %p37 = por %p35, %p36
      %p38 = scmp.ne.s32.totalorder %s24, %s25
      %p39 = scmp.eq.s32.totalorder %s17, 1
      %p40 = por %p38, %p39
      %p42 = scmp.ne.s32.totalorder %s25, %s41
      %p43 = scmp.eq.s32.totalorder %s17, 0
      %p44 = por %p42, %p43
      %s46 = sadd.s32 %s45, 1
      %p49 = scmp.eq.s32.totalorder %s11, 1
      %p50 = scmp.ne.s32.totalorder %s45, %s47
      %p51 = scmp.eq.s32.totalorder %s11, 0
      %p52 = por %p50, %p51
      %p53 = scmp.ne.s32.totalorder %s45, %s47
      %p54 = scmp.eq.s32.totalorder %s16, 1
      %p55 = por %p53, %p54
      %p56 = scmp.ne.s32.totalorder %s47, %s48
      %p57 = scmp.eq.s32.totalorder %s16, 0
      %p58 = por %p56, %p57
      %p59 = scmp.ne.s32.totalorder %s47, %s48
      %p60 = scmp.eq.s32.totalorder %s17, 1
      %p61 = por %p59, %p60
      %p63 = scmp.ne.s32.totalorder %s48, %s62
      %p64 = scmp.eq.s32.totalorder %s17, 0
      %p65 = por %p63, %p64
      %s66 = ssub.s32 %s11, %s18
      %p67 = scmp.eq.s32.totalorder %s66, 0
      %s69 = sadd.s32 %s68, 1
      %s70 = scalar_select %p67, %s68, %s69
      %p73 = pneg %p67
      %p74 = scmp.eq.s32.totalorder %s11, 1
      %p75 = por %p73, %p74
      %p76 = scmp.ne.s32.totalorder %s68, %s71
      %p77 = scmp.eq.s32.totalorder %s11, 0
      %p78 = por %p76, %p77
      %p79 = scmp.ne.s32.totalorder %s68, %s71
      %p80 = scmp.eq.s32.totalorder %s16, 1
      %p81 = por %p79, %p80
      %p82 = scmp.ne.s32.totalorder %s71, %s72
      %p83 = scmp.eq.s32.totalorder %s16, 0
      %p84 = por %p82, %p83
      %p85 = scmp.ne.s32.totalorder %s71, %s72
      %p86 = scmp.eq.s32.totalorder %s17, 1
      %p87 = por %p85, %p86
      %p89 = scmp.ne.s32.totalorder %s72, %s88
      %p90 = scmp.eq.s32.totalorder %s17, 0
      %p91 = por %p89, %p90
      %p92 = scmp.le.s32.totalorder 1, %s11
      %p93 = scmp.lt.s32.totalorder %s11, 3
      %p94 = pnand %p92, %p93
      %p95 = pneg %p94
      // Predicated region
      $region9: #{tpu_custom_call.1} parent=5 // pred_check
        _
      $region10: #{tpu_custom_call.1} parent=5 // pred_check_branch
        %97 = sbr.rel (%p94) target = $region12
      $region11: #{tpu_custom_call.1} parent=5 // pred_region
        %s98 = ssub.s32 %s11, 1
        // Predicated region
        $region13: #{tpu_custom_call.1} parent=11 // pred_check
          %p99 = pneg %p58
        $region14: #{tpu_custom_call.1} parent=11 // pred_check_branch
          %101 = sbr.rel (%p99) target = $region16
        $region15: #{tpu_custom_call.1} parent=11 // pred_region
          _
        $region16: #{tpu_custom_call.1} parent=11 // pred_fallthru
          _
      $region12: #{tpu_custom_call.1} parent=5 // pred_fallthru
        _
      %p102 = scmp.lt.s32.totalorder %s11, 2
      // Predicated region
      $region17: #{tpu_custom_call.1} parent=5 // pred_check
        %p103 = pneg %p102
      $region18: #{tpu_custom_call.1} parent=5 // pred_check_branch
        %105 = sbr.rel (%p103) target = $region20
      $region19: #{tpu_custom_call.1} parent=5 // pred_region
        // Predicated region
        $region21: #{tpu_custom_call.1} parent=19 // pred_check
          %p106 = pneg %p31
        $region22: #{tpu_custom_call.1} parent=19 // pred_check_branch
          %108 = sbr.rel (%p106) target = $region24
        $region23: #{tpu_custom_call.1} parent=19 // pred_region
          %s109 = smul.u32 8, %s11
          %p110 = scmp.lt.s32.totalorder %s109, 15
          %s111 = scalar_select %p110, %s109, 15
          %s112 = smul.addr %s111, 8
          %s113 = scalar_lea.vmem %s0, %s112
          %s114 = smul.u32 8, %s11
        $region24: #{tpu_custom_call.1} parent=19 // pred_fallthru
          _
      $region20: #{tpu_custom_call.1} parent=5 // pred_fallthru
        _
      %p115 = scmp.le.s32.totalorder 1, %s11
      %p116 = scmp.lt.s32.totalorder %s11, 3
      %p117 = pnand %p115, %p116
      %p118 = pneg %p117
      // Predicated region
      $region25: #{tpu_custom_call.1} parent=5 // pred_check
        _
      $region26: #{tpu_custom_call.1} parent=5 // pred_check_branch
        %120 = sbr.rel (%p117) target = $region28
      $region27: #{tpu_custom_call.1} parent=5 // pred_region
        %s121 = ssub.s32 %s11, 1
        %s122 = smul.u32 8, %s16
        %p123 = scmp.lt.s32.totalorder %s122, 15
        %s124 = scalar_select %p123, %s122, 15
        %s125 = smul.addr %s124, 8
        %s126 = scalar_lea.vmem %s0, %s125
        %p127 = pneg %p37
        %p128 = pneg %p34
        %p129 = pneg %p58
        %p130 = pneg %p55
        %p131 = pneg %p84
        %p132 = pneg %p81
        %s133 = sand.u32 %s71, 1
        %s134 = scalar_lea.sflag [#allocation3], %s133
        %s135 = sand.u32 %s71, 1
        %s136 = smul.addr %s135, 64
        %s137 = scalar_lea.vmem [#allocation2], %s136
        %s138 = smul.u32 8, %s16
        %p139 = scmp.lt.s32.totalorder %s138, 15
        %s140 = scalar_select %p139, %s138, 15
        %s141 = smul.addr %s140, 8
        %s142 = scalar_lea.vmem %s0, %s141
        %s143 = smul.u32 8, %s16
        %s144 = smul.u32 8, %s16
        %v145 = vld [vmem:[%s142] sm:$0xff]
        %v146 = vld [vmem:[%s142 + $0x8] sm:$0xff]
        %v147 = vld [vmem:[%s142 + $0x10] sm:$0xff]
        %v148 = vld [vmem:[%s142 + $0x18] sm:$0xff]
        %v149 = vld [vmem:[%s142 + $0x20] sm:$0xff]
        %v150 = vld [vmem:[%s142 + $0x28] sm:$0xff]
        %v151 = vld [vmem:[%s142 + $0x30] sm:$0xff]
        %v152 = vld [vmem:[%s142 + $0x38] sm:$0xff]
        %v153 = vlaneseq
        %v154 = vand.u32 %v153, 127
        %155 = vset.pattern.permute.xlu0 0
        %156 = vperm.xlu0 %155, %v145
        %v157 = vpop.permute.xlu0 %156
        %158 = vset.pattern.permute.xlu0 0
        %159 = vperm.xlu0 %158, %v146
        %v160 = vpop.permute.xlu0 %159
        %161 = vset.pattern.permute.xlu0 0
        %162 = vperm.xlu0 %161, %v147
        %v163 = vpop.permute.xlu0 %162
        %164 = vset.pattern.permute.xlu0 0
        %165 = vperm.xlu0 %164, %v148
        %v166 = vpop.permute.xlu0 %165
        %167 = vset.pattern.permute.xlu0 0
        %168 = vperm.xlu0 %167, %v149
        %v169 = vpop.permute.xlu0 %168
        %170 = vset.pattern.permute.xlu0 0
        %171 = vperm.xlu0 %170, %v150
        %v172 = vpop.permute.xlu0 %171
        %173 = vset.pattern.permute.xlu0 0
        %174 = vperm.xlu0 %173, %v151
        %v175 = vpop.permute.xlu0 %174
        %176 = vset.pattern.permute.xlu0 0
        %177 = vperm.xlu0 %176, %v152
        %v178 = vpop.permute.xlu0 %177
        %vm179 = vcmp.eq.s32.totalorder %v154, %v157
        %vm180 = vcmp.eq.s32.totalorder %v154, %v160
        %vm181 = vcmp.eq.s32.totalorder %v154, %v163
        %vm182 = vcmp.eq.s32.totalorder %v154, %v166
        %vm183 = vcmp.eq.s32.totalorder %v154, %v169
        %vm184 = vcmp.eq.s32.totalorder %v154, %v172
        %vm185 = vcmp.eq.s32.totalorder %v154, %v175
        %vm186 = vcmp.eq.s32.totalorder %v154, %v178
        %v187 = vsel %vm179, 11.313708, 0.0
        %v188 = vsel %vm180, 11.313708, 0.0
        %v189 = vsel %vm181, 11.313708, 0.0
        %v190 = vsel %vm182, 11.313708, 0.0
        %v191 = vsel %vm183, 11.313708, 0.0
        %v192 = vsel %vm184, 11.313708, 0.0
        %v193 = vsel %vm185, 11.313708, 0.0
        %v194 = vsel %vm186, 11.313708, 0.0
        %v195 = vld [vmem:[%s1] sm:$0xff]
        %v196 = vld [vmem:[%s1 + $0x8] sm:$0xff]
        %v197 = vld [vmem:[%s1 + $0x10] sm:$0xff]
        %v198 = vld [vmem:[%s1 + $0x18] sm:$0xff]
        %v199 = vld [vmem:[%s1 + $0x20] sm:$0xff]
        %v200 = vld [vmem:[%s1 + $0x28] sm:$0xff]
        %v201 = vld [vmem:[%s1 + $0x30] sm:$0xff]
        %v202 = vld [vmem:[%s1 + $0x38] sm:$0xff]
        %v203 = vld [vmem:[%s1 + $0x40] sm:$0xff]
        %v204 = vld [vmem:[%s1 + $0x48] sm:$0xff]
        %v205 = vld [vmem:[%s1 + $0x50] sm:$0xff]
        %v206 = vld [vmem:[%s1 + $0x58] sm:$0xff]
        %v207 = vld [vmem:[%s1 + $0x60] sm:$0xff]
        %v208 = vld [vmem:[%s1 + $0x68] sm:$0xff]
        %v209 = vld [vmem:[%s1 + $0x70] sm:$0xff]
        %v210 = vld [vmem:[%s1 + $0x78] sm:$0xff]
        %211 = vmatprep.subr.mxu0 0.0
        %212 = vmatpush1.msra.mxu0 %v195
        %213 = vmatprep.subr.mxu0 0.0
        %214 = vmatpush1.msra.mxu0 %v196
        %215 = vmatprep.subr.mxu0 0.0
        %216 = vmatpush1.msra.mxu0 %v197
        %217 = vmatprep.subr.mxu0 0.0
        %218 = vmatpush1.msra.mxu0 %v198
        %219 = vmatprep.subr.mxu0 0.0
        %220 = vmatpush1.msra.mxu0 %v199
        %221 = vmatprep.subr.mxu0 0.0
        %222 = vmatpush1.msra.mxu0 %v200
        %223 = vmatprep.subr.mxu0 0.0
        %224 = vmatpush1.msra.mxu0 %v201
        %225 = vmatprep.subr.mxu0 0.0
        %226 = vmatpush1.msra.mxu0 %v202
        %227 = vmatprep.subr.mxu0 0.0
        %228 = vmatpush1.msra.mxu0 %v203
        %229 = vmatprep.subr.mxu0 0.0
        %230 = vmatpush1.msra.mxu0 %v204
        %231 = vmatprep.subr.mxu0 0.0
        %232 = vmatpush1.msra.mxu0 %v205
        %233 = vmatprep.subr.mxu0 0.0
        %234 = vmatpush1.msra.mxu0 %v206
        %235 = vmatprep.subr.mxu0 0.0
        %236 = vmatpush1.msra.mxu0 %v207
        %237 = vmatprep.subr.mxu0 0.0
        %238 = vmatpush1.msra.mxu0 %v208
        %239 = vmatprep.subr.mxu0 0.0
        %240 = vmatpush1.msra.mxu0 %v209
        %241 = vmatprep.subr.mxu0 0.0
        %242 = vmatpush1.msra.mxu0 %v210
        %243 = vmatprep.subr.mxu0 0.0
        %244 = vmatpush1.msra.mxu0 0.0
        %245 = vmatprep.subr.mxu0 0.0
        %246 = vmatpush1.msra.mxu0 0.0
        %247 = vmatprep.subr.mxu0 0.0
        %248 = vmatpush1.msra.mxu0 0.0
        %249 = vmatprep.subr.mxu0 0.0
        %250 = vmatpush1.msra.mxu0 0.0
        %251 = vmatprep.subr.mxu0 0.0
        %252 = vmatpush1.msra.mxu0 0.0
        %253 = vmatprep.subr.mxu0 0.0
        %254 = vmatpush1.msra.mxu0 0.0
        %255 = vmatprep.subr.mxu0 0.0
        %256 = vmatpush1.msra.mxu0 0.0
        %257 = vmatprep.subr.mxu0 0.0
        %258 = vmatpush1.msra.mxu0 0.0
        %259 = vmatprep.subr.mxu0 0.0
        %260 = vmatpush1.msra.mxu0 0.0
        %261 = vmatprep.subr.mxu0 0.0
        %262 = vmatpush1.msra.mxu0 0.0
        %263 = vmatprep.subr.mxu0 0.0
        %264 = vmatpush1.msra.mxu0 0.0
        %265 = vmatprep.subr.mxu0 0.0
        %266 = vmatpush1.msra.mxu0 0.0
        %267 = vmatprep.subr.mxu0 0.0
        %268 = vmatpush1.msra.mxu0 0.0
        %269 = vmatprep.subr.mxu0 0.0
        %270 = vmatpush1.msra.mxu0 0.0
        %271 = vmatprep.subr.mxu0 0.0
        %272 = vmatpush1.msra.mxu0 0.0
        %273 = vmatprep.subr.mxu0 0.0
        %274 = vmatpush1.msra.mxu0 0.0
        %275 = vmatprep.mubr.f32.mxu0 0.0
        %276 = vmatmul.mubr.f32.gmra.mrb[0].mxu0 %v187
        %v277 = vpop.f32.mrb[0].mxu0
        %v278 = vadd.f32 0.0, %v277
        %v279 = vpop.f32.mrb[0].mxu0
        %280 = vmatprep.mubr.f32.mxu0 0.0
        %281 = vmatmul.mubr.f32.gmra.mrb[0].mxu0 %v188
        %v282 = vpop.f32.mrb[0].mxu0
        %v283 = vadd.f32 0.0, %v282
        %v284 = vpop.f32.mrb[0].mxu0
        %285 = vmatprep.mubr.f32.mxu0 0.0
        %286 = vmatmul.mubr.f32.gmra.mrb[0].mxu0 %v189
        %v287 = vpop.f32.mrb[0].mxu0
        %v288 = vadd.f32 0.0, %v287
        %v289 = vpop.f32.mrb[0].mxu0
        %290 = vmatprep.mubr.f32.mxu0 0.0
        %291 = vmatmul.mubr.f32.gmra.mrb[0].mxu0 %v190
        %v292 = vpop.f32.mrb[0].mxu0
        %v293 = vadd.f32 0.0, %v292
        %v294 = vpop.f32.mrb[0].mxu0
        %295 = vmatprep.mubr.f32.mxu0 0.0
        %296 = vmatmul.mubr.f32.gmra.mrb[0].mxu0 %v191
        %v297 = vpop.f32.mrb[0].mxu0
        %v298 = vadd.f32 0.0, %v297
        %v299 = vpop.f32.mrb[0].mxu0
        %300 = vmatprep.mubr.f32.mxu0 0.0
        %301 = vmatmul.mubr.f32.gmra.mrb[0].mxu0 %v192
        %v302 = vpop.f32.mrb[0].mxu0
        %v303 = vadd.f32 0.0, %v302
        %v304 = vpop.f32.mrb[0].mxu0
        %305 = vmatprep.mubr.f32.mxu0 0.0
        %306 = vmatmul.mubr.f32.gmra.mrb[0].mxu0 %v193
        %v307 = vpop.f32.mrb[0].mxu0
        %v308 = vadd.f32 0.0, %v307
        %v309 = vpop.f32.mrb[0].mxu0
        %310 = vmatprep.mubr.f32.mxu0 0.0
        %311 = vmatmul.mubr.f32.gmra.mrb[0].mxu0 %v194
        %v312 = vpop.f32.mrb[0].mxu0
        %v313 = vadd.f32 0.0, %v312
        %v314 = vpop.f32.mrb[0].mxu0
        %315 = vdwg.mxu0
        %316 = vst [vmem:[%s137] sm:$0xff] %v278
        %317 = vst [vmem:[%s137 + $0x8] sm:$0xff] %v283
        %318 = vst [vmem:[%s137 + $0x10] sm:$0xff] %v288
        %319 = vst [vmem:[%s137 + $0x18] sm:$0xff] %v293
        %320 = vst [vmem:[%s137 + $0x20] sm:$0xff] %v298
        %321 = vst [vmem:[%s137 + $0x28] sm:$0xff] %v303
        %322 = vst [vmem:[%s137 + $0x30] sm:$0xff] %v308
        %323 = vst [vmem:[%s137 + $0x38] sm:$0xff] %v313
        %s324 = sand.u32 %s71, 1
        %s325 = scalar_lea.sflag [#allocation3], %s324
        %s326 = sand.u32 %s71, 1
        %s327 = smul.addr %s326, 64
        %s328 = scalar_lea.vmem [#allocation2], %s327
        // Predicated region
        $region29: #{tpu_custom_call.1} parent=27 // pred_check
          %p329 = pneg %p81
        $region30: #{tpu_custom_call.1} parent=27 // pred_check_branch
          %331 = sbr.rel (%p329) target = $region32
        $region31: #{tpu_custom_call.1} parent=27 // pred_region
          %s332 = smul.u32 8, %s16
          %s334 = ssub.s32 1024, 1024
          %335 = vsyncadd %s325, %s334
          %s336 = smul.addr %s332, 128
          %s337 = scalar_lea.hbm %s2, %s336
          %s338 = sshll.u32 %s328, 4
          %s339 = int_to_ptr.vmem [resolvable:$true] %s338
          %344 = dma.vmem_to_hbm [thread:$0]  %s339, 1024, %s337, %s325, 128, 128, 8
        $region32: #{tpu_custom_call.1} parent=27 // pred_fallthru
          _
      $region28: #{tpu_custom_call.1} parent=5 // pred_fallthru
        _
      %p345 = scmp.le.s32.totalorder 2, %s11
      // Predicated region
      $region33: #{tpu_custom_call.1} parent=5 // pred_check
        %p346 = pneg %p345
      $region34: #{tpu_custom_call.1} parent=5 // pred_check_branch
        %348 = sbr.rel (%p346) target = $region36
      $region35: #{tpu_custom_call.1} parent=5 // pred_region
        %s349 = ssub.s32 %s11, 2
        // Predicated region
        $region37: #{tpu_custom_call.1} parent=35 // pred_check
          %p350 = pneg %p87
        $region38: #{tpu_custom_call.1} parent=35 // pred_check_branch
          %352 = sbr.rel (%p350) target = $region40
        $region39: #{tpu_custom_call.1} parent=35 // pred_region
          %s353 = sand.u32 %s72, 1
          %s354 = scalar_lea.sflag [#allocation3], %s353
          %s355 = sand.u32 %s72, 1
          %s356 = smul.addr %s355, 64
          %s357 = scalar_lea.vmem [#allocation2], %s356
          %358 = dma.done %s354, 1024
        $region40: #{tpu_custom_call.1} parent=35 // pred_fallthru
          _
      $region36: #{tpu_custom_call.1} parent=5 // pred_fallthru
        _
    $region6: #{tpu_custom_call.1} parent=1 // loop_footer
      %s15 = sadd.s32 1, %s11
    $region7: #{tpu_custom_call.1} parent=1 // loop_footer_branch
      %10 = sbr.rel target = $region3
    $region8: #{tpu_custom_call.1} parent=1 // loop_exit
      _
    %359 = vsyncpa [#allocation3], 1
    %s360 = scalar_lea.sflag [#allocation3], 1
    %361 = vsyncpa %s360, 1

// kernel: tpu_custom_call.1
$region0: #{tpu_custom_call.1}
  #allocation0 [shape = 'u32[]', space=smem, size = 0x4, offset = 0x4, fixed_abs, tag = 'smem constant byte address 0x4 - core index']
  #allocation1 [shape = 'u32[144,128]{1,0:T(1,128)}', space=vmem, size = 0x12000, scoped, tag = 'internal scratch']
  %s0 = inlined_call_operand.vmem [shape: s32[128,1], index: 0, kind: input, shape index: {}]
  %s1 = inlined_call_operand.vmem [shape: f32[128,128], index: 1, kind: input, shape index: {}]
  %s2 = inlined_call_operand.hbm [shape: f32[128,128], index: 2, kind: output, shape index: {}]
  %s3 = sld [smem:[#allocation0]]
  $region41: #{tpu_custom_call.1} parent=0
    _
  %s5 = ssub.s32 1, %s3
  %s6 = scalar_select 0, %s5, %s3
  $region1: #{tpu_custom_call.1} parent=0
    #allocation2 [shape = 'u8[65536]{0}', space=vmem, size = 0x10000, scoped, tag = 'output window, operand 0']
    #allocation3 [shape = 's32[2]{0}', space=sflag, size = 0x8, scoped, tag = 'scoped memory for tpu_custom_call.1']
    %7 = vsyncpa [#allocation3], 0
    %s8 = scalar_lea.sflag [#allocation3], 1
    %9 = vsyncpa %s8, 0
    loop: start=0, step=1, limit=4
    $region2: #{tpu_custom_call.1} parent=1 // loop_pre_header
      _
    $region3: #{tpu_custom_call.1} parent=1 // loop_header
      %s11 = sphi 0, %s15
      %p12 = scmp.ge.s32.totalorder %s11, 4
      %s21 = sphi 0, %s23
      %s24 = sphi 0, %s21
      %s25 = sphi 0, %s24
      %s41 = sphi 0, %s25
      %s45 = sphi 0, %s45
      %s47 = sphi 0, %s45
      %s48 = sphi 0, %s47
      %s62 = sphi 0, %s48
      %s68 = sphi 0, %s70
      %s71 = sphi 0, %s68
      %s72 = sphi 0, %s71
      %s88 = sphi 0, %s72
    $region4: #{tpu_custom_call.1} parent=1 // loop_header_branch
      %14 = sbr.rel (%p12) target = $region8
    $region5: #{tpu_custom_call.1} parent=1 // loop_body
      %s16 = ssub.s32 %s11, 1
      %s17 = ssub.s32 %s11, 2
      %s18 = sadd.s32 %s11, 1
      %s19 = ssub.s32 %s11, %s18
      %p20 = scmp.eq.s32.totalorder %s19, 0
      %s22 = sadd.s32 %s21, 1
      %s23 = scalar_select %p20, %s21, %s22
      %p26 = pneg %p20
      %p27 = scmp.eq.s32.totalorder %s11, 1
      %p28 = por %p26, %p27
      %p29 = scmp.ne.s32.totalorder %s21, %s24
      %p30 = scmp.eq.s32.totalorder %s11, 0
      %p31 = por %p29, %p30
      %p32 = scmp.ne.s32.totalorder %s21, %s24
      %p33 = scmp.eq.s32.totalorder %s16, 1
      %p34 = por %p32, %p33
      %p35 = scmp.ne.s32.totalorder %s24, %s25
      %p36 = scmp.eq.s32.totalorder %s16, 0
      %p37 = por %p35, %p36
      %p38 = scmp.ne.s32.totalorder %s24, %s25
      %p39 = scmp.eq.s32.totalorder %s17, 1
      %p40 = por %p38, %p39
      %p42 = scmp.ne.s32.totalorder %s25, %s41
      %p43 = scmp.eq.s32.totalorder %s17, 0
      %p44 = por %p42, %p43
      %s46 = sadd.s32 %s45, 1
      %p49 = scmp.eq.s32.totalorder %s11, 1
      %p50 = scmp.ne.s32.totalorder %s45, %s47
      %p51 = scmp.eq.s32.totalorder %s11, 0
      %p52 = por %p50, %p51
      %p53 = scmp.ne.s32.totalorder %s45, %s47
      %p54 = scmp.eq.s32.totalorder %s16, 1
      %p55 = por %p53, %p54
      %p56 = scmp.ne.s32.totalorder %s47, %s48
      %p57 = scmp.eq.s32.totalorder %s16, 0
      %p58 = por %p56, %p57
      %p59 = scmp.ne.s32.totalorder %s47, %s48
      %p60 = scmp.eq.s32.totalorder %s17, 1
      %p61 = por %p59, %p60
      %p63 = scmp.ne.s32.totalorder %s48, %s62
      %p64 = scmp.eq.s32.totalorder %s17, 0
      %p65 = por %p63, %p64
      %s66 = ssub.s32 %s11, %s18
      %p67 = scmp.eq.s32.totalorder %s66, 0
      %s69 = sadd.s32 %s68, 1
      %s70 = scalar_select %p67, %s68, %s69
      %p73 = pneg %p67
      %p74 = scmp.eq.s32.totalorder %s11, 1
      %p75 = por %p73, %p74
      %p76 = scmp.ne.s32.totalorder %s68, %s71
      %p77 = scmp.eq.s32.totalorder %s11, 0
      %p78 = por %p76, %p77
      %p79 = scmp.ne.s32.totalorder %s68, %s71
      %p80 = scmp.eq.s32.totalorder %s16, 1
      %p81 = por %p79, %p80
      %p82 = scmp.ne.s32.totalorder %s71, %s72
      %p83 = scmp.eq.s32.totalorder %s16, 0
      %p84 = por %p82, %p83
      %p85 = scmp.ne.s32.totalorder %s71, %s72
      %p86 = scmp.eq.s32.totalorder %s17, 1
      %p87 = por %p85, %p86
      %p89 = scmp.ne.s32.totalorder %s72, %s88
      %p90 = scmp.eq.s32.totalorder %s17, 0
      %p91 = por %p89, %p90
      %p92 = scmp.le.s32.totalorder 1, %s11
      %p93 = scmp.lt.s32.totalorder %s11, 3
      %p94 = pnand %p92, %p93
      %p95 = pneg %p94
      // Predicated region
      $region9: #{tpu_custom_call.1} parent=5 // pred_check
        _
      $region10: #{tpu_custom_call.1} parent=5 // pred_check_branch
        %97 = sbr.rel (%p94) target = $region12
      $region11: #{tpu_custom_call.1} parent=5 // pred_region
        %s98 = ssub.s32 %s11, 1
        // Predicated region
        $region13: #{tpu_custom_call.1} parent=11 // pred_check
          %p99 = pneg %p58
        $region14: #{tpu_custom_call.1} parent=11 // pred_check_branch
          %101 = sbr.rel (%p99) target = $region16
        $region15: #{tpu_custom_call.1} parent=11 // pred_region
          _
        $region16: #{tpu_custom_call.1} parent=11 // pred_fallthru
          _
      $region12: #{tpu_custom_call.1} parent=5 // pred_fallthru
        _
      %p102 = scmp.lt.s32.totalorder %s11, 2
      // Predicated region
      $region17: #{tpu_custom_call.1} parent=5 // pred_check
        %p103 = pneg %p102
      $region18: #{tpu_custom_call.1} parent=5 // pred_check_branch
        %105 = sbr.rel (%p103) target = $region20
      $region19: #{tpu_custom_call.1} parent=5 // pred_region
        // Predicated region
        $region21: #{tpu_custom_call.1} parent=19 // pred_check
          %p106 = pneg %p31
        $region22: #{tpu_custom_call.1} parent=19 // pred_check_branch
          %108 = sbr.rel (%p106) target = $region24
        $region23: #{tpu_custom_call.1} parent=19 // pred_region
          %s109 = smul.u32 8, %s11
          %p110 = scmp.lt.s32.totalorder %s109, 15
          %s111 = scalar_select %p110, %s109, 15
          %s112 = smul.addr %s111, 8
          %s113 = scalar_lea.vmem %s0, %s112
          %s114 = smul.u32 8, %s11
        $region24: #{tpu_custom_call.1} parent=19 // pred_fallthru
          _
      $region20: #{tpu_custom_call.1} parent=5 // pred_fallthru
        _
      %p115 = scmp.le.s32.totalorder 1, %s11
      %p116 = scmp.lt.s32.totalorder %s11, 3
      %p117 = pnand %p115, %p116
      %p118 = pneg %p117
      // Predicated region
      $region25: #{tpu_custom_call.1} parent=5 // pred_check
        _
      $region26: #{tpu_custom_call.1} parent=5 // pred_check_branch
        %120 = sbr.rel (%p117) target = $region28
      $region27: #{tpu_custom_call.1} parent=5 // pred_region
        %s121 = ssub.s32 %s11, 1
        %s122 = smul.u32 8, %s16
        %p123 = scmp.lt.s32.totalorder %s122, 15
        %s124 = scalar_select %p123, %s122, 15
        %s125 = smul.addr %s124, 8
        %s126 = scalar_lea.vmem %s0, %s125
        %p127 = pneg %p37
        %p128 = pneg %p34
        %p129 = pneg %p58
        %p130 = pneg %p55
        %p131 = pneg %p84
        %p132 = pneg %p81
        %s133 = sand.u32 %s71, 1
        %s134 = scalar_lea.sflag [#allocation3], %s133
        %s135 = sand.u32 %s71, 1
        %s136 = smul.addr %s135, 64
        %s137 = scalar_lea.vmem [#allocation2], %s136
        %s138 = smul.u32 8, %s16
        %p139 = scmp.lt.s32.totalorder %s138, 15
        %s140 = scalar_select %p139, %s138, 15
        %s141 = smul.addr %s140, 8
        %s142 = scalar_lea.vmem %s0, %s141
        %s143 = smul.u32 8, %s16
        %s144 = smul.u32 8, %s16
        %v145 = vld [vmem:[%s142] sm:$0xff]
        %v146 = vld [vmem:[%s142 + $0x8] sm:$0xff]
        %v147 = vld [vmem:[%s142 + $0x10] sm:$0xff]
        %v148 = vld [vmem:[%s142 + $0x18] sm:$0xff]
        %v149 = vld [vmem:[%s142 + $0x20] sm:$0xff]
        %v150 = vld [vmem:[%s142 + $0x28] sm:$0xff]
        %v151 = vld [vmem:[%s142 + $0x30] sm:$0xff]
        %v152 = vld [vmem:[%s142 + $0x38] sm:$0xff]
        %v153 = vlaneseq
        %v154 = vand.u32 %v153, 127
        %155 = vset.pattern.permute.xlu0 0
        %156 = vperm.xlu0 %155, %v145
        %v157 = vpop.permute.xlu0 %156
        %158 = vset.pattern.permute.xlu0 0
        %159 = vperm.xlu0 %158, %v146
        %v160 = vpop.permute.xlu0 %159
        %161 = vset.pattern.permute.xlu0 0
        %162 = vperm.xlu0 %161, %v147
        %v163 = vpop.permute.xlu0 %162
        %164 = vset.pattern.permute.xlu0 0
        %165 = vperm.xlu0 %164, %v148
        %v166 = vpop.permute.xlu0 %165
        %167 = vset.pattern.permute.xlu0 0
        %168 = vperm.xlu0 %167, %v149
        %v169 = vpop.permute.xlu0 %168
        %170 = vset.pattern.permute.xlu0 0
        %171 = vperm.xlu0 %170, %v150
        %v172 = vpop.permute.xlu0 %171
        %173 = vset.pattern.permute.xlu0 0
        %174 = vperm.xlu0 %173, %v151
        %v175 = vpop.permute.xlu0 %174
        %176 = vset.pattern.permute.xlu0 0
        %177 = vperm.xlu0 %176, %v152
        %v178 = vpop.permute.xlu0 %177
        %vm179 = vcmp.eq.s32.totalorder %v154, %v157
        %vm180 = vcmp.eq.s32.totalorder %v154, %v160
        %vm181 = vcmp.eq.s32.totalorder %v154, %v163
        %vm182 = vcmp.eq.s32.totalorder %v154, %v166
        %vm183 = vcmp.eq.s32.totalorder %v154, %v169
        %vm184 = vcmp.eq.s32.totalorder %v154, %v172
        %vm185 = vcmp.eq.s32.totalorder %v154, %v175
        %vm186 = vcmp.eq.s32.totalorder %v154, %v178
        %v187 = vsel %vm179, 11.313708, 0.0
        %v188 = vsel %vm180, 11.313708, 0.0
        %v189 = vsel %vm181, 11.313708, 0.0
        %v190 = vsel %vm182, 11.313708, 0.0
        %v191 = vsel %vm183, 11.313708, 0.0
        %v192 = vsel %vm184, 11.313708, 0.0
        %v193 = vsel %vm185, 11.313708, 0.0
        %v194 = vsel %vm186, 11.313708, 0.0
        %v195 = vld [vmem:[%s1] sm:$0xff]
        %v196 = vld [vmem:[%s1 + $0x8] sm:$0xff]
        %v197 = vld [vmem:[%s1 + $0x10] sm:$0xff]
        %v198 = vld [vmem:[%s1 + $0x18] sm:$0xff]
        %v199 = vld [vmem:[%s1 + $0x20] sm:$0xff]
        %v200 = vld [vmem:[%s1 + $0x28] sm:$0xff]
        %v201 = vld [vmem:[%s1 + $0x30] sm:$0xff]
        %v202 = vld [vmem:[%s1 + $0x38] sm:$0xff]
        %v203 = vld [vmem:[%s1 + $0x40] sm:$0xff]
        %v204 = vld [vmem:[%s1 + $0x48] sm:$0xff]
        %v205 = vld [vmem:[%s1 + $0x50] sm:$0xff]
        %v206 = vld [vmem:[%s1 + $0x58] sm:$0xff]
        %v207 = vld [vmem:[%s1 + $0x60] sm:$0xff]
        %v208 = vld [vmem:[%s1 + $0x68] sm:$0xff]
        %v209 = vld [vmem:[%s1 + $0x70] sm:$0xff]
        %v210 = vld [vmem:[%s1 + $0x78] sm:$0xff]
        %211 = vmatprep.subr.mxu0 0.0
        %212 = vmatpush1.msra.mxu0 %v195
        %213 = vmatprep.subr.mxu0 0.0
        %214 = vmatpush1.msra.mxu0 %v196
        %215 = vmatprep.subr.mxu0 0.0
        %216 = vmatpush1.msra.mxu0 %v197
        %217 = vmatprep.subr.mxu0 0.0
        %218 = vmatpush1.msra.mxu0 %v198
        %219 = vmatprep.subr.mxu0 0.0
        %220 = vmatpush1.msra.mxu0 %v199
        %221 = vmatprep.subr.mxu0 0.0
        %222 = vmatpush1.msra.mxu0 %v200
        %223 = vmatprep.subr.mxu0 0.0
        %224 = vmatpush1.msra.mxu0 %v201
        %225 = vmatprep.subr.mxu0 0.0
        %226 = vmatpush1.msra.mxu0 %v202
        %227 = vmatprep.subr.mxu0 0.0
        %228 = vmatpush1.msra.mxu0 %v203
        %229 = vmatprep.subr.mxu0 0.0
        %230 = vmatpush1.msra.mxu0 %v204
        %231 = vmatprep.subr.mxu0 0.0
        %232 = vmatpush1.msra.mxu0 %v205
        %233 = vmatprep.subr.mxu0 0.0
        %234 = vmatpush1.msra.mxu0 %v206
        %235 = vmatprep.subr.mxu0 0.0
        %236 = vmatpush1.msra.mxu0 %v207
        %237 = vmatprep.subr.mxu0 0.0
        %238 = vmatpush1.msra.mxu0 %v208
        %239 = vmatprep.subr.mxu0 0.0
        %240 = vmatpush1.msra.mxu0 %v209
        %241 = vmatprep.subr.mxu0 0.0
        %242 = vmatpush1.msra.mxu0 %v210
        %243 = vmatprep.subr.mxu0 0.0
        %244 = vmatpush1.msra.mxu0 0.0
        %245 = vmatprep.subr.mxu0 0.0
        %246 = vmatpush1.msra.mxu0 0.0
        %247 = vmatprep.subr.mxu0 0.0
        %248 = vmatpush1.msra.mxu0 0.0
        %249 = vmatprep.subr.mxu0 0.0
        %250 = vmatpush1.msra.mxu0 0.0
        %251 = vmatprep.subr.mxu0 0.0
        %252 = vmatpush1.msra.mxu0 0.0
        %253 = vmatprep.subr.mxu0 0.0
        %254 = vmatpush1.msra.mxu0 0.0
        %255 = vmatprep.subr.mxu0 0.0
        %256 = vmatpush1.msra.mxu0 0.0
        %257 = vmatprep.subr.mxu0 0.0
        %258 = vmatpush1.msra.mxu0 0.0
        %259 = vmatprep.subr.mxu0 0.0
        %260 = vmatpush1.msra.mxu0 0.0
        %261 = vmatprep.subr.mxu0 0.0
        %262 = vmatpush1.msra.mxu0 0.0
        %263 = vmatprep.subr.mxu0 0.0
        %264 = vmatpush1.msra.mxu0 0.0
        %265 = vmatprep.subr.mxu0 0.0
        %266 = vmatpush1.msra.mxu0 0.0
        %267 = vmatprep.subr.mxu0 0.0
        %268 = vmatpush1.msra.mxu0 0.0
        %269 = vmatprep.subr.mxu0 0.0
        %270 = vmatpush1.msra.mxu0 0.0
        %271 = vmatprep.subr.mxu0 0.0
        %272 = vmatpush1.msra.mxu0 0.0
        %273 = vmatprep.subr.mxu0 0.0
        %274 = vmatpush1.msra.mxu0 0.0
        %275 = vmatprep.mubr.f32.mxu0 0.0
        %276 = vmatmul.mubr.f32.gmra.mrb[0].mxu0 %v187
        %v277 = vpop.f32.mrb[0].mxu0
        %v278 = vadd.f32 0.0, %v277
        %v279 = vpop.f32.mrb[0].mxu0
        %280 = vmatprep.mubr.f32.mxu0 0.0
        %281 = vmatmul.mubr.f32.gmra.mrb[0].mxu0 %v188
        %v282 = vpop.f32.mrb[0].mxu0
        %v283 = vadd.f32 0.0, %v282
        %v284 = vpop.f32.mrb[0].mxu0
        %285 = vmatprep.mubr.f32.mxu0 0.0
        %286 = vmatmul.mubr.f32.gmra.mrb[0].mxu0 %v189
        %v287 = vpop.f32.mrb[0].mxu0
        %v288 = vadd.f32 0.0, %v287
        %v289 = vpop.f32.mrb[0].mxu0
        %290 = vmatprep.mubr.f32.mxu0 0.0
        %291 = vmatmul.mubr.f32.gmra.mrb[0].mxu0 %v190
        %v292 = vpop.f32.mrb[0].mxu0
        %v293 = vadd.f32 0.0, %v292
        %v294 = vpop.f32.mrb[0].mxu0
        %295 = vmatprep.mubr.f32.mxu0 0.0
        %296 = vmatmul.mubr.f32.gmra.mrb[0].mxu0 %v191
        %v297 = vpop.f32.mrb[0].mxu0
        %v298 = vadd.f32 0.0, %v297
        %v299 = vpop.f32.mrb[0].mxu0
        %300 = vmatprep.mubr.f32.mxu0 0.0
        %301 = vmatmul.mubr.f32.gmra.mrb[0].mxu0 %v192
        %v302 = vpop.f32.mrb[0].mxu0
        %v303 = vadd.f32 0.0, %v302
        %v304 = vpop.f32.mrb[0].mxu0
        %305 = vmatprep.mubr.f32.mxu0 0.0
        %306 = vmatmul.mubr.f32.gmra.mrb[0].mxu0 %v193
        %v307 = vpop.f32.mrb[0].mxu0
        %v308 = vadd.f32 0.0, %v307
        %v309 = vpop.f32.mrb[0].mxu0
        %310 = vmatprep.mubr.f32.mxu0 0.0
        %311 = vmatmul.mubr.f32.gmra.mrb[0].mxu0 %v194
        %v312 = vpop.f32.mrb[0].mxu0
        %v313 = vadd.f32 0.0, %v312
        %v314 = vpop.f32.mrb[0].mxu0
        %315 = vdwg.mxu0
        %316 = vst [vmem:[%s137] sm:$0xff] %v278
        %317 = vst [vmem:[%s137 + $0x8] sm:$0xff] %v283
        %318 = vst [vmem:[%s137 + $0x10] sm:$0xff] %v288
        %319 = vst [vmem:[%s137 + $0x18] sm:$0xff] %v293
        %320 = vst [vmem:[%s137 + $0x20] sm:$0xff] %v298
        %321 = vst [vmem:[%s137 + $0x28] sm:$0xff] %v303
        %322 = vst [vmem:[%s137 + $0x30] sm:$0xff] %v308
        %323 = vst [vmem:[%s137 + $0x38] sm:$0xff] %v313
        %s324 = sand.u32 %s71, 1
        %s325 = scalar_lea.sflag [#allocation3], %s324
        %s326 = sand.u32 %s71, 1
        %s327 = smul.addr %s326, 64
        %s328 = scalar_lea.vmem [#allocation2], %s327
        // Predicated region
        $region29: #{tpu_custom_call.1} parent=27 // pred_check
          %p329 = pneg %p81
        $region30: #{tpu_custom_call.1} parent=27 // pred_check_branch
          %331 = sbr.rel (%p329) target = $region32
        $region31: #{tpu_custom_call.1} parent=27 // pred_region
          %s332 = smul.u32 8, %s16
          %s334 = ssub.s32 1024, 1024
          %335 = vsyncadd %s325, %s334
          %s336 = smul.addr %s332, 128
          %s337 = scalar_lea.hbm %s2, %s336
          %s338 = sshll.u32 %s328, 4
          %s339 = int_to_ptr.vmem [resolvable:$true] %s338
          %344 = dma.vmem_to_hbm [thread:$0]  %s339, 1024, %s337, %s325, 128, 128, 8
        $region32: #{tpu_custom_call.1} parent=27 // pred_fallthru
          _
      $region28: #{tpu_custom_call.1} parent=5 // pred_fallthru
        _
      %p345 = scmp.le.s32.totalorder 2, %s11
      // Predicated region
      $region33: #{tpu_custom_call.1} parent=5 // pred_check
        %p346 = pneg %p345
      $region34: #{tpu_custom_call.1} parent=5 // pred_check_branch
        %348 = sbr.rel (%p346) target = $region36
      $region35: #{tpu_custom_call.1} parent=5 // pred_region
        %s349 = ssub.s32 %s11, 2
        // Predicated region
        $region37: #{tpu_custom_call.1} parent=35 // pred_check
          %p350 = pneg %p87
        $region38: #{tpu_custom_call.1} parent=35 // pred_check_branch
          %352 = sbr.rel (%p350) target = $region40
        $region39: #{tpu_custom_call.1} parent=35 // pred_region
          %s353 = sand.u32 %s72, 1
          %s354 = scalar_lea.sflag [#allocation3], %s353
          %s355 = sand.u32 %s72, 1
          %s356 = smul.addr %s355, 64
          %s357 = scalar_lea.vmem [#allocation2], %s356
          %358 = dma.done %s354, 1024
        $region40: #{tpu_custom_call.1} parent=35 // pred_fallthru
          _
      $region36: #{tpu_custom_call.1} parent=5 // pred_fallthru
        _
    $region6: #{tpu_custom_call.1} parent=1 // loop_footer
      %s15 = sadd.s32 1, %s11
    $region7: #{tpu_custom_call.1} parent=1 // loop_footer_branch
      %10 = sbr.rel target = $region3
    $region8: #{tpu_custom_call.1} parent=1 // loop_exit
      _
    %359 = vsyncpa [#allocation3], 1
    %s360 = scalar_lea.sflag [#allocation3], 1
    %361 = vsyncpa %s360, 1

</llo_original>
